<compile_context>
chip_gen: v7x
topology: tpu7x:2x2x1
jax: 0.10.0
libtpu: 0.0.40
codegen_flags: <defaults>
</compile_context>

<pallas_src>
import jax
import jax.numpy as jnp
from jax.experimental import pallas as pl
from jax.experimental.pallas import tpu as pltpu


# ------------------------------ Pallas kernels ------------------------------ #
def xw_kernel(x_ref, w_ref, o_ref):
    # H[tile] = X[tile] @ W   (computed once per layer per row tile)
    o_ref[...] = jnp.dot(
        x_ref[...], w_ref[...], preferred_element_type=jnp.float32
    ).astype(o_ref.dtype)


def xw_matmul(x, w, *, tm=128):
    """H = X @ W, row-tiled.  x: (Np, Cin) bf16, w: (Cin, Cp) bf16 -> (Np, Cp) bf16."""
    n_pad, cin = x.shape
    cp = w.shape[1]
    return pl.pallas_call(
        xw_kernel,
        out_shape=jax.ShapeDtypeStruct((n_pad, cp), jnp.bfloat16),
        grid_spec=pltpu.PrefetchScalarGridSpec(
            num_scalar_prefetch=0,
            grid=(n_pad // tm,),
            in_specs=[
                pl.BlockSpec((tm, cin), lambda i: (i, 0)),   # X row tile
                pl.BlockSpec((cin, cp), lambda i: (0, 0)),   # full W
            ],
            out_specs=pl.BlockSpec((tm, cp), lambda i: (i, 0)),
        ),
        compiler_params=pltpu.CompilerParams(dimension_semantics=("parallel",)),
    )(x, w)


def agg_kernel(a_ref, h_ref, b_ref, o_ref, acc_ref):
    # out[tile] = relu( sum_k A[tile, k] @ H[k] + b )
    kk = pl.program_id(1)

    @pl.when(kk == 0)
    def _():
        acc_ref[...] = jnp.zeros_like(acc_ref)

    acc_ref[...] += jnp.dot(
        a_ref[...], h_ref[...], preferred_element_type=jnp.float32
    )

    @pl.when(kk == pl.num_programs(1) - 1)
    def _():
        o_ref[...] = jnp.maximum(acc_ref[...] + b_ref[...], 0.0).astype(o_ref.dtype)


def agg_layer(a, h, b, *, tm=128, tk=512, out_dtype=jnp.bfloat16):
    """relu(A @ H + b).  a: (Np, Np) bf16, h: (Np, Cp) bf16, b: (1, Cp) f32."""
    n_pad = a.shape[0]
    cp = h.shape[1]
    tk = _pick_tile(n_pad, tk)
    return pl.pallas_call(
        agg_kernel,
        out_shape=jax.ShapeDtypeStruct((n_pad, cp), out_dtype),
        grid_spec=pltpu.PrefetchScalarGridSpec(
            num_scalar_prefetch=0,
            grid=(n_pad // tm, n_pad // tk),
            in_specs=[
                pl.BlockSpec((tm, tk), lambda i, k: (i, k)),   # A tile
                pl.BlockSpec((tk, cp), lambda i, k: (k, 0)),   # H contraction slab
                pl.BlockSpec((1, cp), lambda i, k: (0, 0)),    # bias
            ],
            out_specs=pl.BlockSpec((tm, cp), lambda i, k: (i, 0)),
            scratch_shapes=[pltpu.VMEM((tm, cp), jnp.float32)],
        ),
        compiler_params=pltpu.CompilerParams(
            dimension_semantics=("parallel", "arbitrary")),
    )(a, h, b)


# ------------------------------- glue (JAX) --------------------------------- #
def _round_up(x, m):
    return ((x + m - 1) // m) * m


def _pick_tile(n_pad, cap):
    """Largest multiple of 128 that divides n_pad and is <= cap."""
    t = max(128, (min(cap, n_pad) // 128) * 128)
    while n_pad % t != 0:
        t -= 128
    return t


def normalized_adjacency(edge_index, num_nodes):
    """Dense GCN-normalized adjacency: D^{-1/2} (A + I) D^{-1/2}."""
    src, dst = edge_index[0], edge_index[1]
    a = jnp.zeros((num_nodes, num_nodes), jnp.float32)
    a = a.at[dst, src].set(1.0)              # edge j -> i aggregates x_j into row i
    idx = jnp.arange(num_nodes)
    a = a.at[idx, idx].set(1.0)              # exactly one self-loop per node
    deg = a.sum(axis=1)
    d_inv_sqrt = jnp.where(deg > 0, 1.0 / jnp.sqrt(deg), 0.0)
    return a * d_inv_sqrt[:, None] * d_inv_sqrt[None, :]


def init_linear(key, fan_in, fan_out):
    """PyTorch-style uniform(-1/sqrt(fan_in), 1/sqrt(fan_in)) init."""
    kw, kb = jax.random.split(key)
    bound = 1.0 / jnp.sqrt(fan_in)
    w = jax.random.uniform(kw, (fan_in, fan_out), jnp.float32, -bound, bound)
    b = jax.random.uniform(kb, (fan_out,), jnp.float32, -bound, bound)
    return w, b


def make_grace_params(key, in_channels, hidden_channels, project_channels, k):
    keys = jax.random.split(key, k + 3)
    conv_params = []
    # Encoder.__init__ builds k+1 convs; forward only uses the first k.
    dims = [(in_channels, hidden_channels)] + [(hidden_channels, hidden_channels)] * k
    for i, (ci, co) in enumerate(dims):
        conv_params.append(init_linear(keys[i], ci, co))
    fc1 = init_linear(keys[k + 1], hidden_channels, project_channels)  # unused in forward
    fc2 = init_linear(keys[k + 2], project_channels, hidden_channels)  # unused in forward
    return {"convs": conv_params, "fc1": fc1, "fc2": fc2}


def grace_forward(params, x, edge_index, *, k, tm=128, tk=512):
    """GRACE.forward(x, e) == Encoder.forward: k x (GCN conv -> ReLU)."""
    num_nodes, in_c = x.shape
    n_pad = _round_up(num_nodes, tm)

    # Build A once, pad to 128-aligned N, cast to bf16 once and reuse across layers.
    a_norm = normalized_adjacency(edge_index, num_nodes)
    a_p = jnp.zeros((n_pad, n_pad), jnp.bfloat16)
    a_p = a_p.at[:num_nodes, :num_nodes].set(a_norm.astype(jnp.bfloat16))

    # Pad node rows of the input features; channels start unpadded (full-dim block).
    h = jnp.zeros((n_pad, in_c), jnp.bfloat16).at[:num_nodes, :].set(
        x.astype(jnp.bfloat16))

    cout_last = in_c
    for i in range(k):                       # convs[k] exists but is never used, as in PyTorch
        w, b = params["convs"][i]
        cin_i, cout_i = w.shape
        cp = _round_up(cout_i, 128)          # lane-dense output channels
        # Pad W rows to the (possibly padded) channel count of h, cols to cp.
        w_p = jnp.zeros((h.shape[1], cp), jnp.bfloat16)
        w_p = w_p.at[:cin_i, :cout_i].set(w.astype(jnp.bfloat16))
        b_p = jnp.zeros((1, cp), jnp.float32).at[0, :cout_i].set(b)

        hw = xw_matmul(h, w_p, tm=tm)        # X @ W once per layer
        out_dtype = jnp.float32 if i == k - 1 else jnp.bfloat16
        h = agg_layer(a_p, hw, b_p, tm=tm, tk=tk, out_dtype=out_dtype)
        cout_last = cout_i

    return h[:num_nodes, :cout_last]
    # TODO(synk): projection()/sim()/semi_loss()/loss() are not part of forward();
    #             only the encoder forward is implemented here.


# ---------------------------------- main ------------------------------------ #
if __name__ == "__main__":
    N = 64            # number of nodes
    IN_C = 16         # input feature channels
    HIDDEN = 32       # hidden_channels (encoder out_channels)
    PROJ = 16         # project_channels (unused in forward)
    K = 2             # encoder depth
    NUM_EDGES = 128

    key = jax.random.PRNGKey(0)
    k_x, k_e, k_p = jax.random.split(key, 3)

    x = jax.random.normal(k_x, (N, IN_C), jnp.float32)
    edge_index = jax.random.randint(k_e, (2, NUM_EDGES), 0, N, jnp.int32)
    params = make_grace_params(k_p, IN_C, HIDDEN, PROJ, K)

    h = grace_forward(params, x, edge_index, k=K)
    h = jax.block_until_ready(h)

    assert h.shape == (N, HIDDEN)
    assert jnp.all(jnp.isfinite(h))
    print("KERNEL_OK")
</pallas_src>

<mosaic_0001>
module attributes {stable_mosaic.version = 11 : i64} {
  func.func @xw_kernel(%arg0: i32, %arg1: memref<128x16xbf16, #tpu.memory_space<vmem>>, %arg2: memref<16x128xbf16, #tpu.memory_space<vmem>>, %arg3: memref<128x128xbf16, #tpu.memory_space<vmem>>) attributes {dimension_semantics = [#tpu.dimension_semantics<parallel>], iteration_bounds = array<i64: 1>, scalar_prefetch = 0 : i64, scratch_operands = 0 : i64, tpu.core_type = #tpu.core_type<tc>, window_params = [{transform_indices = @transform_0, window_bounds = array<i64: 128, 16>}, {pipeline_mode = #tpu.pipeline_mode<synchronous>, transform_indices = @transform_1, window_bounds = array<i64: 16, 128>}, {transform_indices = @transform_2, window_bounds = array<i64: 128, 128>}]} {
    %c0 = arith.constant 0 : index
    %c0_0 = arith.constant 0 : index
    %0 = vector.load %arg1[%c0, %c0_0] : memref<128x16xbf16, #tpu.memory_space<vmem>>, vector<128x16xbf16>
    %c0_1 = arith.constant 0 : index
    %c0_2 = arith.constant 0 : index
    %1 = vector.load %arg2[%c0_1, %c0_2] : memref<16x128xbf16, #tpu.memory_space<vmem>>, vector<16x128xbf16>
    %cst = arith.constant dense<0.000000e+00> : vector<128x128xf32>
    %2 = tpu.matmul %0, %1, %cst {dimension_numbers = #tpu.dot_dimension_numbers<[1], [0], [0], [1], [0, 0, 1, 1], [], []>} : vector<128x16xbf16>, vector<16x128xbf16>, vector<128x128xf32> -> vector<128x128xf32>
    %3 = arith.truncf %2 : vector<128x128xf32> to vector<128x128xbf16>
    %c0_3 = arith.constant 0 : index
    %c0_4 = arith.constant 0 : index
    %4 = vector.load %arg3[%c0_3, %c0_4] : memref<128x128xbf16, #tpu.memory_space<vmem>>, vector<128x128xbf16>
    tpu.vector_store %arg3[%c0_3, %c0_4], %3 {strides = array<i32>} : memref<128x128xbf16, #tpu.memory_space<vmem>>, vector<128x128xbf16>,
    return
  }
  func.func @transform_0(%arg0: i32) -> (i32, i32) {
    %c0_i32 = arith.constant 0 : i32
    %c0_i32_0 = arith.constant 0 : i32
    return %arg0, %c0_i32 : i32, i32
  }
  func.func @transform_1(%arg0: i32) -> (i32, i32) {
    %c0_i32 = arith.constant 0 : i32
    %c0_i32_0 = arith.constant 0 : i32
    %c0_i32_1 = arith.constant 0 : i32
    return %c0_i32, %c0_i32_0 : i32, i32
  }
  func.func @transform_2(%arg0: i32) -> (i32, i32) {
    %c0_i32 = arith.constant 0 : i32
    %c0_i32_0 = arith.constant 0 : i32
    return %arg0, %c0_i32 : i32, i32
  }
}

</mosaic_0001>

<llo_original>
// kernel: tpu_custom_call.1
$region0: #{tpu_custom_call.1}
  #allocation0 [shape = 'u32[]', space=smem, size = 0x4, offset = 0x4, fixed_abs, tag = 'smem constant byte address 0x4 - core index']
  #allocation1 [shape = 'u32[144,128]{1,0:T(1,128)}', space=vmem, size = 0x12000, scoped, tag = 'internal scratch']
  %s0 = inlined_call_operand.vmem [shape: bf16[128,16], index: 0, kind: input, shape index: {}]
  %s1 = inlined_call_operand.vmem [shape: bf16[16,128], index: 1, kind: input, shape index: {}]
  %s2 = inlined_call_operand.hbm [shape: bf16[128,128], index: 2, kind: output, shape index: {}]
  %s3 = sld [smem:[#allocation0]]
  $region18: #{tpu_custom_call.1} parent=0
    _
  %s5 = ssub.s32 1, %s3
  %s6 = scalar_select 0, %s5, %s3
  $region1: #{tpu_custom_call.1} parent=0
    #allocation2 [shape = 'u8[32768]{0}', space=vmem, size = 0x8000, scoped, tag = 'output window, operand 0, single buffered']
    #allocation3 [shape = 's32[1]{0}', space=sflag, size = 0x4, scoped, tag = 'scoped memory for tpu_custom_call.1']
    %7 = vsyncpa [#allocation3], 0
    // Predicated region
    $region2: #{tpu_custom_call.1} parent=1 // pred_check
      _
    $region3: #{tpu_custom_call.1} parent=1 // pred_check_branch
      %9 = sbr.rel (0) target = $region5
    $region4: #{tpu_custom_call.1} parent=1 // pred_region
      _
    $region5: #{tpu_custom_call.1} parent=1 // pred_fallthru
      _
    // Predicated region
    $region6: #{tpu_custom_call.1} parent=1 // pred_check
      _
    $region7: #{tpu_custom_call.1} parent=1 // pred_check_branch
      %11 = sbr.rel (0) target = $region9
    $region8: #{tpu_custom_call.1} parent=1 // pred_region
      _
    $region9: #{tpu_custom_call.1} parent=1 // pred_fallthru
      _
    %v13 = vld [vmem:[%s0] sm:$0xf]
    %v14 = vld [vmem:[%s0 + $0x4] sm:$0xf]
    %v15 = vld [vmem:[%s0 + $0x8] sm:$0xf]
    %v16 = vld [vmem:[%s0 + $0xc] sm:$0xf]
    %v17 = vld [vmem:[%s0 + $0x10] sm:$0xf]
    %v18 = vld [vmem:[%s0 + $0x14] sm:$0xf]
    %v19 = vld [vmem:[%s0 + $0x18] sm:$0xf]
    %v20 = vld [vmem:[%s0 + $0x1c] sm:$0xf]
    %v21 = vld [vmem:[%s0 + $0x20] sm:$0xf]
    %v22 = vld [vmem:[%s0 + $0x24] sm:$0xf]
    %v23 = vld [vmem:[%s0 + $0x28] sm:$0xf]
    %v24 = vld [vmem:[%s0 + $0x2c] sm:$0xf]
    %v25 = vld [vmem:[%s0 + $0x30] sm:$0xf]
    %v26 = vld [vmem:[%s0 + $0x34] sm:$0xf]
    %v27 = vld [vmem:[%s0 + $0x38] sm:$0xf]
    %v28 = vld [vmem:[%s0 + $0x3c] sm:$0xf]
    %v29 = vld [vmem:[%s1] sm:$0xf]
    %v30 = vld [vmem:[%s1 + $0x4] sm:$0xf]
    %v47 = vunpack.c.l.b16 %v13
    %v48 = vunpack.c.l.b16 %v14
    %v49 = vunpack.c.l.b16 %v15
    %v50 = vunpack.c.l.b16 %v16
    %v51 = vunpack.c.l.b16 %v17
    %v52 = vunpack.c.l.b16 %v18
    %v53 = vunpack.c.l.b16 %v19
    %v54 = vunpack.c.l.b16 %v20
    %v55 = vunpack.c.l.b16 %v21
    %v56 = vunpack.c.l.b16 %v22
    %v57 = vunpack.c.l.b16 %v23
    %v58 = vunpack.c.l.b16 %v24
    %v59 = vunpack.c.l.b16 %v25
    %v60 = vunpack.c.l.b16 %v26
    %v61 = vunpack.c.l.b16 %v27
    %v62 = vunpack.c.l.b16 %v28
    %v63 = vpack.c.b16 %v48, %v47
    %v64 = vpack.c.b16 %v50, %v49
    %v65 = vpack.c.b16 %v52, %v51
    %v66 = vpack.c.b16 %v54, %v53
    %v67 = vpack.c.b16 %v56, %v55
    %v68 = vpack.c.b16 %v58, %v57
    %v69 = vpack.c.b16 %v60, %v59
    %v70 = vpack.c.b16 %v62, %v61
    %v73 = vunpack.c.l.b16 %v29
    %v74 = vunpack.c.l.b16 %v30
    %v75 = vpack.c.b16 %v74, %v73
    %vm77 = vcmask 130048
    %v79 = vsel %vm77, %v63, 0
    %v82 = vsel %vm77, %v64, 0
    %v85 = vsel %vm77, %v65, 0
    %v88 = vsel %vm77, %v66, 0
    %v91 = vsel %vm77, %v67, 0
    %v94 = vsel %vm77, %v68, 0
    %v97 = vsel %vm77, %v69, 0
    %v100 = vsel %vm77, %v70, 0
    %102 = vmatprep.subr.bf16.mxu0 0
    %103 = vmatpush1.bf16.msra.mxu0 %v75
    %104 = vmatprep.subr.bf16.mxu0 0
    %105 = vmatpush1.bf16.msra.mxu0 0
    %106 = vmatprep.subr.bf16.mxu0 0
    %107 = vmatpush1.bf16.msra.mxu0 0
    %108 = vmatprep.subr.bf16.mxu0 0
    %109 = vmatpush1.bf16.msra.mxu0 0
    %110 = vmatprep.subr.bf16.mxu0 0
    %111 = vmatpush1.bf16.msra.mxu0 0
    %112 = vmatprep.subr.bf16.mxu0 0
    %113 = vmatpush1.bf16.msra.mxu0 0
    %114 = vmatprep.subr.bf16.mxu0 0
    %115 = vmatpush1.bf16.msra.mxu0 0
    %116 = vmatprep.subr.bf16.mxu0 0
    %117 = vmatpush1.bf16.msra.mxu0 0
    %118 = vmatprep.subr.bf16.mxu0 0
    %119 = vmatpush1.bf16.msra.mxu0 0
    %120 = vmatprep.subr.bf16.mxu0 0
    %121 = vmatpush1.bf16.msra.mxu0 0
    %122 = vmatprep.subr.bf16.mxu0 0
    %123 = vmatpush1.bf16.msra.mxu0 0
    %124 = vmatprep.subr.bf16.mxu0 0
    %125 = vmatpush1.bf16.msra.mxu0 0
    %126 = vmatprep.subr.bf16.mxu0 0
    %127 = vmatpush1.bf16.msra.mxu0 0
    %128 = vmatprep.subr.bf16.mxu0 0
    %129 = vmatpush1.bf16.msra.mxu0 0
    %130 = vmatprep.subr.bf16.mxu0 0
    %131 = vmatpush1.bf16.msra.mxu0 0
    %132 = vmatprep.subr.bf16.mxu0 0
    %133 = vmatpush1.bf16.msra.mxu0 0
    %134 = vmatprep.mubr.bf16.mxu0 0
    %135 = vmatmul.mubr.bf16.gmra.mrb[0].mxu0 %v79
    %v136 = vpop.f32.mrb[0].mxu0
    %v137 = vadd.f32 0.0, %v136
    %v138 = vpop.f32.mrb[0].mxu0
    %v139 = vpop.f32.mrb[0].mxu0
    %v140 = vadd.f32 0.0, %v139
    %v141 = vpop.f32.mrb[0].mxu0
    %142 = vmatprep.mubr.bf16.mxu0 0
    %143 = vmatmul.mubr.bf16.gmra.mrb[0].mxu0 %v82
    %v144 = vpop.f32.mrb[0].mxu0
    %v145 = vadd.f32 0.0, %v144
    %v146 = vpop.f32.mrb[0].mxu0
    %v147 = vpop.f32.mrb[0].mxu0
    %v148 = vadd.f32 0.0, %v147
    %v149 = vpop.f32.mrb[0].mxu0
    %150 = vmatprep.mubr.bf16.mxu0 0
    %151 = vmatmul.mubr.bf16.gmra.mrb[0].mxu0 %v85
    %v152 = vpop.f32.mrb[0].mxu0
    %v153 = vadd.f32 0.0, %v152
    %v154 = vpop.f32.mrb[0].mxu0
    %v155 = vpop.f32.mrb[0].mxu0
    %v156 = vadd.f32 0.0, %v155
    %v157 = vpop.f32.mrb[0].mxu0
    %158 = vmatprep.mubr.bf16.mxu0 0
    %159 = vmatmul.mubr.bf16.gmra.mrb[0].mxu0 %v88
    %v160 = vpop.f32.mrb[0].mxu0
    %v161 = vadd.f32 0.0, %v160
    %v162 = vpop.f32.mrb[0].mxu0
    %v163 = vpop.f32.mrb[0].mxu0
    %v164 = vadd.f32 0.0, %v163
    %v165 = vpop.f32.mrb[0].mxu0
    %166 = vmatprep.mubr.bf16.mxu0 0
    %167 = vmatmul.mubr.bf16.gmra.mrb[0].mxu0 %v91
    %v168 = vpop.f32.mrb[0].mxu0
    %v169 = vadd.f32 0.0, %v168
    %v170 = vpop.f32.mrb[0].mxu0
    %v171 = vpop.f32.mrb[0].mxu0
    %v172 = vadd.f32 0.0, %v171
    %v173 = vpop.f32.mrb[0].mxu0
    %174 = vmatprep.mubr.bf16.mxu0 0
    %175 = vmatmul.mubr.bf16.gmra.mrb[0].mxu0 %v94
    %v176 = vpop.f32.mrb[0].mxu0
    %v177 = vadd.f32 0.0, %v176
    %v178 = vpop.f32.mrb[0].mxu0
    %v179 = vpop.f32.mrb[0].mxu0
    %v180 = vadd.f32 0.0, %v179
    %v181 = vpop.f32.mrb[0].mxu0
    %182 = vmatprep.mubr.bf16.mxu0 0
    %183 = vmatmul.mubr.bf16.gmra.mrb[0].mxu0 %v97
    %v184 = vpop.f32.mrb[0].mxu0
    %v185 = vadd.f32 0.0, %v184
    %v186 = vpop.f32.mrb[0].mxu0
    %v187 = vpop.f32.mrb[0].mxu0
    %v188 = vadd.f32 0.0, %v187
    %v189 = vpop.f32.mrb[0].mxu0
    %190 = vmatprep.mubr.bf16.mxu0 0
    %191 = vmatmul.mubr.bf16.gmra.mrb[0].mxu0 %v100
    %v192 = vpop.f32.mrb[0].mxu0
    %v193 = vadd.f32 0.0, %v192
    %v194 = vpop.f32.mrb[0].mxu0
    %v195 = vpop.f32.mrb[0].mxu0
    %v196 = vadd.f32 0.0, %v195
    %v197 = vpop.f32.mrb[0].mxu0
    %198 = vdwg.mxu0
    %v199 = vpack.c.bf16 %v140, %v137
    %v200 = vpack.c.bf16 %v148, %v145
    %v201 = vpack.c.bf16 %v156, %v153
    %v202 = vpack.c.bf16 %v164, %v161
    %v203 = vpack.c.bf16 %v172, %v169
    %v204 = vpack.c.bf16 %v180, %v177
    %v205 = vpack.c.bf16 %v188, %v185
    %v206 = vpack.c.bf16 %v196, %v193
    %v215 = vunpack.c.l.b16 %v199
    %v216 = vunpack.c.h.b16 %v199
    %v217 = vunpack.c.l.b16 %v200
    %v218 = vunpack.c.h.b16 %v200
    %v219 = vunpack.c.l.b16 %v201
    %v220 = vunpack.c.h.b16 %v201
    %v221 = vunpack.c.l.b16 %v202
    %v222 = vunpack.c.h.b16 %v202
    %v223 = vunpack.c.l.b16 %v203
    %v224 = vunpack.c.h.b16 %v203
    %v225 = vunpack.c.l.b16 %v204
    %v226 = vunpack.c.h.b16 %v204
    %v227 = vunpack.c.l.b16 %v205
    %v228 = vunpack.c.h.b16 %v205
    %v229 = vunpack.c.l.b16 %v206
    %v230 = vunpack.c.h.b16 %v206
    %v231 = vpack.c.b16 %v215, %v215
    %v232 = vpack.c.b16 %v216, %v216
    %v233 = vpack.c.b16 %v217, %v217
    %v234 = vpack.c.b16 %v218, %v218
    %v235 = vpack.c.b16 %v219, %v219
    %v236 = vpack.c.b16 %v220, %v220
    %v237 = vpack.c.b16 %v221, %v221
    %v238 = vpack.c.b16 %v222, %v222
    %v239 = vpack.c.b16 %v223, %v223
    %v240 = vpack.c.b16 %v224, %v224
    %v241 = vpack.c.b16 %v225, %v225
    %v242 = vpack.c.b16 %v226, %v226
    %v243 = vpack.c.b16 %v227, %v227
    %v244 = vpack.c.b16 %v228, %v228
    %v245 = vpack.c.b16 %v229, %v229
    %v246 = vpack.c.b16 %v230, %v230
    %263 = vst [vmem:[#allocation2] sm:$0xf] %v231
    %264 = vst [vmem:[#allocation2 + $0x4] sm:$0xf] %v232
    %265 = vst [vmem:[#allocation2 + $0x8] sm:$0xf] %v233
    %266 = vst [vmem:[#allocation2 + $0xc] sm:$0xf] %v234
    %267 = vst [vmem:[#allocation2 + $0x10] sm:$0xf] %v235
    %268 = vst [vmem:[#allocation2 + $0x14] sm:$0xf] %v236
    %269 = vst [vmem:[#allocation2 + $0x18] sm:$0xf] %v237
    %270 = vst [vmem:[#allocation2 + $0x1c] sm:$0xf] %v238
    %271 = vst [vmem:[#allocation2 + $0x20] sm:$0xf] %v239
    %272 = vst [vmem:[#allocation2 + $0x24] sm:$0xf] %v240
    %273 = vst [vmem:[#allocation2 + $0x28] sm:$0xf] %v241
    %274 = vst [vmem:[#allocation2 + $0x2c] sm:$0xf] %v242
    %275 = vst [vmem:[#allocation2 + $0x30] sm:$0xf] %v243
    %276 = vst [vmem:[#allocation2 + $0x34] sm:$0xf] %v244
    %277 = vst [vmem:[#allocation2 + $0x38] sm:$0xf] %v245
    %278 = vst [vmem:[#allocation2 + $0x3c] sm:$0xf] %v246
    // Predicated region
    $region10: #{tpu_custom_call.1} parent=1 // pred_check
      _
    $region11: #{tpu_custom_call.1} parent=1 // pred_check_branch
      %280 = sbr.rel (0) target = $region13
    $region12: #{tpu_custom_call.1} parent=1 // pred_region
      %s282 = ssub.s32 1024, 1024
      %283 = vsyncadd [#allocation3], %s282
      %s284 = sshll.u32 [#allocation2], 4
      %s285 = int_to_ptr.vmem [resolvable:$true] %s284
      %290 = dma.vmem_to_hbm [thread:$0]  %s285, 1024, %s2, [#allocation3], 64, 64, 4
    $region13: #{tpu_custom_call.1} parent=1 // pred_fallthru
      _
    // Predicated region
    $region14: #{tpu_custom_call.1} parent=1 // pred_check
      _
    $region15: #{tpu_custom_call.1} parent=1 // pred_check_branch
      %292 = sbr.rel (0) target = $region17
    $region16: #{tpu_custom_call.1} parent=1 // pred_region
      %293 = dma.done [#allocation3], 1024
    $region17: #{tpu_custom_call.1} parent=1 // pred_fallthru
      _
    %294 = vsyncpa [#allocation3], 1

</llo_original>
